<compile_context>
chip_gen: v6e
topology: v6e:2x2x1
jax: 0.10.0
libtpu: 0.0.40
codegen_flags: <defaults>
</compile_context>

<pallas_src>
import functools

import numpy as np
import jax
import jax.numpy as jnp
from jax import lax
from jax.experimental import pallas as pl
from jax.experimental.pallas import tpu as pltpu

EPS = 1e-8
CL_TEMP = 0.1              # config.cl_temp
_COL_TILE = 256            # TN
_VMEM_BUDGET = 20 * 1024 * 1024   # conservative working-set budget for tile pick


def _round_up(x, m):
    return (x + m - 1) // m * m


def _pick_tiles(n, d_pad, mm_bytes):
    """Pick (n_pad, tm, tn): TN fixed at 256, TM grown to 512/1024 when it fits
    the VMEM budget and keeps >= 2 row tiles (megacore)."""
    n8 = _round_up(max(n, 8), 8)
    if n8 <= _COL_TILE:
        return n8, n8, n8
    tn = _COL_TILE
    n_pad = _round_up(n8, tn)
    tm = tn
    for cand in (1024, 512):
        if n_pad % cand != 0 or n_pad // cand < 2:
            continue
        need = (2 * cand * d_pad * mm_bytes      # row operand (2x buffered)
                + 2 * d_pad * tn * mm_bytes      # col operand (2x buffered)
                + 4 * cand * tn * 4)             # sim / exp / select intermediates
        if need <= _VMEM_BUDGET:
            tm = cand
            break
    return n_pad, tm, tn


# ------------------------------ Pallas kernel ------------------------------ #
def _tcl_matrix_kernel(row_ref, colt_ref, seg_row_ref, seg_col_ref, out_ref,
                       num_acc, den_acc, *, n_valid, n_pad, tm, tn):
    """One (row-tile, col-tile) step of the matrix-type topic contrastive loss.

    row_ref:     (TM, D) pre-normalized features, 1/temp folded in
    colt_ref:    (D, TN) pre-normalized features, pre-transposed
    seg_row_ref: (TM, 1) i32 segment id per row (-1 for padding)
    seg_col_ref: (1, TN) i32 segment id per column (-1 for padding)
    out_ref:     (TM, 1) f32 -log(num/den) per valid row (0 for pad rows)
    num_acc/den_acc: (TM, 1) f32 VMEM scratch accumulators
    """
    i = pl.program_id(0)
    j = pl.program_id(1)
    n_col_tiles = pl.num_programs(1)

    @pl.when(j == 0)
    def _():
        num_acc[...] = jnp.zeros_like(num_acc)
        den_acc[...] = jnp.zeros_like(den_acc)

    # sim[r, c] = cos(x_r, x_c) / temp  (single MXU contraction, f32 accumulate)
    sim = jnp.dot(row_ref[...], colt_ref[...], preferred_element_type=jnp.float32)
    e = jnp.exp(sim)                                               # (TM, TN)
    same_seg = seg_row_ref[...] == seg_col_ref[...]                # (TM, TN)

    # Element masking is only needed on tiles that intersect the diagonal or
    # (when N was padded) on the last column tile; everything else is fast path.
    row0 = i * tm
    col0 = j * tn
    has_diag = jnp.logical_and(col0 < row0 + tm, row0 < col0 + tn)
    if n_valid < n_pad:                                            # static
        needs_mask = jnp.logical_or(has_diag, j == n_col_tiles - 1)
    else:
        needs_mask = has_diag

    @pl.when(jnp.logical_not(needs_mask))
    def _():  # fast path: plain row-sums, no iota / compare / extra select
        den_acc[...] += jnp.sum(e, axis=1, keepdims=True)
        num_acc[...] += jnp.sum(jnp.where(same_seg, e, 0.0), axis=1, keepdims=True)

    @pl.when(needs_mask)
    def _():  # slow path: exclude the diagonal (and padded columns) exactly
        ri = lax.broadcasted_iota(jnp.int32, (tm, tn), 0) + row0
        ci = lax.broadcasted_iota(jnp.int32, (tm, tn), 1) + col0
        keep = ri != ci
        if n_valid < n_pad:                                        # static
            keep = jnp.logical_and(keep, ci < n_valid)
        den_acc[...] += jnp.sum(jnp.where(keep, e, 0.0), axis=1, keepdims=True)
        num_acc[...] += jnp.sum(
            jnp.where(jnp.logical_and(same_seg, keep), e, 0.0),
            axis=1, keepdims=True)

    @pl.when(j == n_col_tiles - 1)
    def _():
        # -log(num/den) = log(den + eps) - log(num + eps)
        loss = jnp.log(den_acc[...] + EPS) - jnp.log(num_acc[...] + EPS)
        if n_valid < n_pad:                                        # static
            rr = lax.broadcasted_iota(jnp.int32, (tm, 1), 0) + row0
            loss = jnp.where(rr < n_valid, loss, 0.0)
        out_ref[...] = loss


# --------------------------------- wrapper ---------------------------------- #
def topic_contrastive_matrix_loss(seq_features, seg_ids, *, temp=CL_TEMP,
                                  matmul_dtype=None):
    """seq_features: (N, D) float; seg_ids: (N,) int32 topic/segment id per row."""
    seq_features = jnp.asarray(seq_features, jnp.float32)
    seg_ids = jnp.asarray(seg_ids, jnp.int32)
    n, d = seq_features.shape

    d_pad = _round_up(d, 128)
    if matmul_dtype is None:
        # f32 operands when D is small (MXU is not the bottleneck there and the
        # folded 1/temp stays accurate); bf16 for large D (halves feature HBM
        # traffic, f32 accumulation on the MXU).
        matmul_dtype = jnp.float32 if d_pad <= 512 else jnp.bfloat16
    mm_bytes = jnp.dtype(matmul_dtype).itemsize
    n_pad, tm, tn = _pick_tiles(n, d_pad, mm_bytes)

    # temp == 0 -> raw cosine similarities (matches the torch Similarity module)
    inv_temp = 1.0 if temp == 0 else 1.0 / float(temp)

    # One-time XLA preprocessing (hoisted out of the kernel): pad, normalize
    # exactly like torch (x / (||x|| + eps)), fold 1/temp into the row operand,
    # cast to the matmul dtype, pre-transpose the column operand.
    feat = jnp.zeros((n_pad, d_pad), jnp.float32).at[:n, :d].set(seq_features)
    feat = feat / (jnp.sqrt(jnp.sum(feat * feat, axis=1, keepdims=True)) + EPS)
    row_op = (feat * inv_temp).astype(matmul_dtype)            # (n_pad, d_pad)
    col_op = feat.astype(matmul_dtype).T                       # (d_pad, n_pad)

    seg = jnp.full((n_pad,), -1, jnp.int32).at[:n].set(seg_ids)
    seg_row = seg.reshape(n_pad, 1)
    seg_col = seg.reshape(1, n_pad)

    kernel = functools.partial(_tcl_matrix_kernel,
                               n_valid=n, n_pad=n_pad, tm=tm, tn=tn)

    # Explicit VMEM limit with headroom; kept well below v7x's 64 MiB physical.
    vmem_est = (2 * tm * d_pad * mm_bytes + 2 * d_pad * tn * mm_bytes
                + 4 * tm * tn * 4 + 4 * tm * 4 + 4 * (tm + tn) * 4)
    vmem_limit = int(min(56 * 1024 * 1024, max(32 * 1024 * 1024, 2 * vmem_est)))

    grid = (n_pad // tm, n_pad // tn)
    out = pl.pallas_call(
        kernel,
        out_shape=jax.ShapeDtypeStruct((n_pad, 1), jnp.float32),
        grid=grid,
        in_specs=[
            pl.BlockSpec((tm, d_pad), lambda i, j: (i, 0)),    # row operand
            pl.BlockSpec((d_pad, tn), lambda i, j: (0, j)),    # col operand (K,N)
            pl.BlockSpec((tm, 1), lambda i, j: (i, 0)),        # seg id per row
            pl.BlockSpec((1, tn), lambda i, j: (0, j)),        # seg id per col
        ],
        out_specs=pl.BlockSpec((tm, 1), lambda i, j: (i, 0)),
        scratch_shapes=[pltpu.VMEM((tm, 1), jnp.float32),
                        pltpu.VMEM((tm, 1), jnp.float32)],
        compiler_params=pltpu.CompilerParams(
            dimension_semantics=("parallel", "arbitrary"),
            vmem_limit_bytes=vmem_limit),
    )(row_op, col_op, seg_row, seg_col)

    return jnp.sum(out) / n


# --------------------------- host-side label glue --------------------------- #
def get_valid_labels_np(labels):
    """Mirror of TopicContrastiveLearning.get_valid_labels (ragged filtering)."""
    labels = np.asarray(labels)
    mask = labels != -100
    valid_counts = mask.sum(1)
    last_label_indices = np.cumsum(valid_counts) - 1
    valid = labels[mask].copy()            # row-major, same as torch boolean mask
    valid[last_label_indices] = 1
    return valid


def seg_ids_from_valid_labels(valid_labels):
    """Segment id of row i = number of boundary labels (==1) strictly before i.
    Equivalent to get_chunk_mask_for_matrix_loss's block structure."""
    ones = (np.asarray(valid_labels) == 1).astype(np.int64)
    return np.concatenate([[0], np.cumsum(ones)[:-1]]).astype(np.int32)


# --------------------------------- reference -------------------------------- #
def _reference_loss_np(feat, valid_labels, temp=CL_TEMP):
    feat = np.asarray(feat, np.float64)
    n = feat.shape[0]
    xn = feat / (np.linalg.norm(feat, axis=1, keepdims=True) + EPS)
    sim = xn @ xn.T
    if temp != 0:
        sim = sim / temp
    e = np.exp(sim)
    seg = seg_ids_from_valid_labels(valid_labels)
    same = seg[:, None] == seg[None, :]
    offdiag = ~np.eye(n, dtype=bool)
    num = (e * (same & offdiag)).sum(1) + EPS
    den = (e * offdiag).sum(1) + EPS
    return float((-np.log(num / den)).mean())


# ----------------------------------- main ----------------------------------- #
if __name__ == "__main__":
    # labels: (batch=2, seq=8) with -100 padding (as in the PyTorch module)
    labels = np.array(
        [[0, 1, 0, 0, 1, 0, -100, -100],
         [0, 0, 1, 0, 0, -100, -100, -100]],
        dtype=np.int32,
    )
    valid_labels = get_valid_labels_np(labels)          # (N_valid,) = (11,)
    seg_ids = seg_ids_from_valid_labels(valid_labels)   # (11,)
    n_valid = valid_labels.shape[0]
    hidden = 32

    key = jax.random.PRNGKey(0)
    seq_features = jax.random.normal(key, (n_valid, hidden), dtype=jnp.float32)

    loss_fn = jax.jit(
        lambda f, s: topic_contrastive_matrix_loss(f, s, temp=CL_TEMP))
    loss = jax.block_until_ready(loss_fn(seq_features, jnp.asarray(seg_ids)))

    ref = _reference_loss_np(np.asarray(seq_features), valid_labels, temp=CL_TEMP)
    assert np.isfinite(float(loss))
    # Small-D path uses f32 matmul operands (much tighter than bf16); keep the
    # tolerance at the previously validated bf16 level to stay robust to MXU
    # f32-pass lowering details.
    np.testing.assert_allclose(float(loss), ref, rtol=3e-2, atol=1e-2)

    print("KERNEL_OK")
</pallas_src>

<mosaic_0001>
module attributes {stable_mosaic.version = 11 : i64} {
  func.func @_tcl_matrix_kernel(%arg0: i32, %arg1: i32, %arg2: memref<16x128xf32, #tpu.memory_space<vmem>>, %arg3: memref<128x16xf32, #tpu.memory_space<vmem>>, %arg4: memref<16x1xi32, #tpu.memory_space<vmem>>, %arg5: memref<1x16xi32, #tpu.memory_space<vmem>>, %arg6: memref<16x1xf32, #tpu.memory_space<vmem>>, %arg7: memref<16x1xf32, #tpu.memory_space<vmem>>, %arg8: memref<16x1xf32, #tpu.memory_space<vmem>>) attributes {dimension_semantics = [#tpu.dimension_semantics<parallel>, #tpu.dimension_semantics<arbitrary>], iteration_bounds = array<i64: 1, 1>, scalar_prefetch = 0 : i64, scratch_operands = 2 : i64, tpu.core_type = #tpu.core_type<tc>, window_params = [{transform_indices = @transform_0, window_bounds = array<i64: 16, 128>}, {transform_indices = @transform_1, window_bounds = array<i64: 128, 16>}, {transform_indices = @transform_2, window_bounds = array<i64: 16, 1>}, {transform_indices = @transform_3, window_bounds = array<i64: 1, 16>}, {transform_indices = @transform_4, window_bounds = array<i64: 16, 1>}]} {
    %c0_i32 = arith.constant 0 : i32
    %0 = arith.cmpi eq, %arg1, %c0_i32 : i32
    %1 = arith.extui %0 : i1 to i32
    %c0_i32_0 = arith.constant 0 : i32
    %2 = arith.cmpi ne, %1, %c0_i32_0 : i32
    scf.if %2 {
      %cst_16 = arith.constant 0.000000e+00 : f32
      %29 = vector.broadcast %cst_16 : f32 to vector<16x1xf32>
      %c0_17 = arith.constant 0 : index
      %c0_18 = arith.constant 0 : index
      %30 = vector.load %arg7[%c0_17, %c0_18] : memref<16x1xf32, #tpu.memory_space<vmem>>, vector<16x1xf32>
      tpu.vector_store %arg7[%c0_17, %c0_18], %29 {strides = array<i32>} : memref<16x1xf32, #tpu.memory_space<vmem>>, vector<16x1xf32>,
      %cst_19 = arith.constant 0.000000e+00 : f32
      %31 = vector.broadcast %cst_19 : f32 to vector<16x1xf32>
      %c0_20 = arith.constant 0 : index
      %c0_21 = arith.constant 0 : index
      %32 = vector.load %arg8[%c0_20, %c0_21] : memref<16x1xf32, #tpu.memory_space<vmem>>, vector<16x1xf32>
      tpu.vector_store %arg8[%c0_20, %c0_21], %31 {strides = array<i32>} : memref<16x1xf32, #tpu.memory_space<vmem>>, vector<16x1xf32>,
    } else {
    }
    %c0 = arith.constant 0 : index
    %c0_1 = arith.constant 0 : index
    %3 = vector.load %arg2[%c0, %c0_1] : memref<16x128xf32, #tpu.memory_space<vmem>>, vector<16x128xf32>
    %c0_2 = arith.constant 0 : index
    %c0_3 = arith.constant 0 : index
    %4 = vector.load %arg3[%c0_2, %c0_3] : memref<128x16xf32, #tpu.memory_space<vmem>>, vector<128x16xf32>
    %cst = arith.constant dense<0.000000e+00> : vector<16x16xf32>
    %5 = tpu.matmul %3, %4, %cst {dimension_numbers = #tpu.dot_dimension_numbers<[1], [0], [0], [1], [0, 0, 1, 1], [], []>} : vector<16x128xf32>, vector<128x16xf32>, vector<16x16xf32> -> vector<16x16xf32>
    %6 = math.exp %5 : vector<16x16xf32>
    %c0_4 = arith.constant 0 : index
    %c0_5 = arith.constant 0 : index
    %7 = vector.load %arg4[%c0_4, %c0_5] : memref<16x1xi32, #tpu.memory_space<vmem>>, vector<16x1xi32>
    %c0_6 = arith.constant 0 : index
    %c0_7 = arith.constant 0 : index
    %8 = vector.load %arg5[%c0_6, %c0_7] : memref<1x16xi32, #tpu.memory_space<vmem>>, vector<1x16xi32>
    %9 = vector.broadcast %7 : vector<16x1xi32> to vector<16x16xi32>
    %10 = vector.broadcast %8 : vector<1x16xi32> to vector<16x16xi32>
    %11 = arith.cmpi eq, %9, %10 : vector<16x16xi32>
    %c16_i32 = arith.constant 16 : i32
    %12 = arith.muli %arg0, %c16_i32 : i32
    %c16_i32_8 = arith.constant 16 : i32
    %13 = arith.muli %arg1, %c16_i32_8 : i32
    %c16_i32_9 = arith.constant 16 : i32
    %14 = arith.addi %12, %c16_i32_9 : i32
    %15 = arith.cmpi slt, %13, %14 : i32
    %c16_i32_10 = arith.constant 16 : i32
    %16 = arith.addi %13, %c16_i32_10 : i32
    %17 = arith.cmpi slt, %12, %16 : i32
    %18 = arith.andi %15, %17 : i1
    %c0_i32_11 = arith.constant 0 : i32
    %19 = arith.cmpi eq, %arg1, %c0_i32_11 : i32
    %20 = arith.ori %18, %19 : i1
    %true = arith.constant true
    %21 = arith.xori %20, %true : i1
    %22 = arith.extui %21 : i1 to i32
    %c0_i32_12 = arith.constant 0 : i32
    %23 = arith.cmpi ne, %22, %c0_i32_12 : i32
    scf.if %23 {
      %c0_16 = arith.constant 0 : index
      %c0_17 = arith.constant 0 : index
      %29 = vector.load %arg8[%c0_16, %c0_17] : memref<16x1xf32, #tpu.memory_space<vmem>>, vector<16x1xf32>
      %cst_18 = arith.constant dense<0.000000e+00> : vector<16xf32>
      %30 = vector.multi_reduction <add>, %6, %cst_18 [1] : vector<16x16xf32> to vector<16xf32>
      %31 = vector.shape_cast %30 : vector<16xf32> to vector<16x1xf32>
      %32 = arith.addf %29, %31 : vector<16x1xf32>
      %c0_19 = arith.constant 0 : index
      %c0_20 = arith.constant 0 : index
      %33 = vector.load %arg8[%c0_19, %c0_20] : memref<16x1xf32, #tpu.memory_space<vmem>>, vector<16x1xf32>
      tpu.vector_store %arg8[%c0_19, %c0_20], %32 {strides = array<i32>} : memref<16x1xf32, #tpu.memory_space<vmem>>, vector<16x1xf32>,
      %c0_21 = arith.constant 0 : index
      %c0_22 = arith.constant 0 : index
      %34 = vector.load %arg7[%c0_21, %c0_22] : memref<16x1xf32, #tpu.memory_space<vmem>>, vector<16x1xf32>
      %cst_23 = arith.constant 0.000000e+00 : f32
      %35 = vector.broadcast %cst_23 : f32 to vector<16x16xf32>
      %36 = arith.select %11, %6, %35 : vector<16x16xi1>, vector<16x16xf32>
      %cst_24 = arith.constant dense<0.000000e+00> : vector<16xf32>
      %37 = vector.multi_reduction <add>, %36, %cst_24 [1] : vector<16x16xf32> to vector<16xf32>
      %38 = vector.shape_cast %37 : vector<16xf32> to vector<16x1xf32>
      %39 = arith.addf %34, %38 : vector<16x1xf32>
      %c0_25 = arith.constant 0 : index
      %c0_26 = arith.constant 0 : index
      %40 = vector.load %arg7[%c0_25, %c0_26] : memref<16x1xf32, #tpu.memory_space<vmem>>, vector<16x1xf32>
      tpu.vector_store %arg7[%c0_25, %c0_26], %39 {strides = array<i32>} : memref<16x1xf32, #tpu.memory_space<vmem>>, vector<16x1xf32>,
    } else {
    }
    %24 = arith.extui %20 : i1 to i32
    %c0_i32_13 = arith.constant 0 : i32
    %25 = arith.cmpi ne, %24, %c0_i32_13 : i32
    scf.if %25 {
      %29 = tpu.iota {dimensions = array<i32: 0>} : vector<16x16xi32>
      %30 = vector.broadcast %12 : i32 to vector<16x16xi32>
      %31 = arith.addi %29, %30 : vector<16x16xi32>
      %32 = tpu.iota {dimensions = array<i32: 1>} : vector<16x16xi32>
      %33 = vector.broadcast %13 : i32 to vector<16x16xi32>
      %34 = arith.addi %32, %33 : vector<16x16xi32>
      %35 = arith.cmpi ne, %31, %34 : vector<16x16xi32>
      %c11_i32 = arith.constant 11 : i32
      %36 = vector.broadcast %c11_i32 : i32 to vector<16x16xi32>
      %37 = arith.cmpi slt, %34, %36 : vector<16x16xi32>
      %38 = arith.andi %35, %37 : vector<16x16xi1>
      %c0_16 = arith.constant 0 : index
      %c0_17 = arith.constant 0 : index
      %39 = vector.load %arg8[%c0_16, %c0_17] : memref<16x1xf32, #tpu.memory_space<vmem>>, vector<16x1xf32>
      %cst_18 = arith.constant 0.000000e+00 : f32
      %40 = vector.broadcast %cst_18 : f32 to vector<16x16xf32>
      %41 = arith.select %38, %6, %40 : vector<16x16xi1>, vector<16x16xf32>
      %cst_19 = arith.constant dense<0.000000e+00> : vector<16xf32>
      %42 = vector.multi_reduction <add>, %41, %cst_19 [1] : vector<16x16xf32> to vector<16xf32>
      %43 = vector.shape_cast %42 : vector<16xf32> to vector<16x1xf32>
      %44 = arith.addf %39, %43 : vector<16x1xf32>
      %c0_20 = arith.constant 0 : index
      %c0_21 = arith.constant 0 : index
      %45 = vector.load %arg8[%c0_20, %c0_21] : memref<16x1xf32, #tpu.memory_space<vmem>>, vector<16x1xf32>
      tpu.vector_store %arg8[%c0_20, %c0_21], %44 {strides = array<i32>} : memref<16x1xf32, #tpu.memory_space<vmem>>, vector<16x1xf32>,
      %c0_22 = arith.constant 0 : index
      %c0_23 = arith.constant 0 : index
      %46 = vector.load %arg7[%c0_22, %c0_23] : memref<16x1xf32, #tpu.memory_space<vmem>>, vector<16x1xf32>
      %47 = arith.andi %11, %38 : vector<16x16xi1>
      %cst_24 = arith.constant 0.000000e+00 : f32
      %48 = vector.broadcast %cst_24 : f32 to vector<16x16xf32>
      %49 = arith.select %47, %6, %48 : vector<16x16xi1>, vector<16x16xf32>
      %cst_25 = arith.constant dense<0.000000e+00> : vector<16xf32>
      %50 = vector.multi_reduction <add>, %49, %cst_25 [1] : vector<16x16xf32> to vector<16xf32>
      %51 = vector.shape_cast %50 : vector<16xf32> to vector<16x1xf32>
      %52 = arith.addf %46, %51 : vector<16x1xf32>
      %c0_26 = arith.constant 0 : index
      %c0_27 = arith.constant 0 : index
      %53 = vector.load %arg7[%c0_26, %c0_27] : memref<16x1xf32, #tpu.memory_space<vmem>>, vector<16x1xf32>
      tpu.vector_store %arg7[%c0_26, %c0_27], %52 {strides = array<i32>} : memref<16x1xf32, #tpu.memory_space<vmem>>, vector<16x1xf32>,
    } else {
    }
    %c0_i32_14 = arith.constant 0 : i32
    %26 = arith.cmpi eq, %arg1, %c0_i32_14 : i32
    %27 = arith.extui %26 : i1 to i32
    %c0_i32_15 = arith.constant 0 : i32
    %28 = arith.cmpi ne, %27, %c0_i32_15 : i32
    scf.if %28 {
      %c0_16 = arith.constant 0 : index
      %c0_17 = arith.constant 0 : index
      %29 = vector.load %arg8[%c0_16, %c0_17] : memref<16x1xf32, #tpu.memory_space<vmem>>, vector<16x1xf32>
      %cst_18 = arith.constant 9.99999993E-9 : f32
      %30 = vector.broadcast %cst_18 : f32 to vector<16x1xf32>
      %31 = arith.addf %29, %30 : vector<16x1xf32>
      %32 = math.log %31 : vector<16x1xf32>
      %c0_19 = arith.constant 0 : index
      %c0_20 = arith.constant 0 : index
      %33 = vector.load %arg7[%c0_19, %c0_20] : memref<16x1xf32, #tpu.memory_space<vmem>>, vector<16x1xf32>
      %cst_21 = arith.constant 9.99999993E-9 : f32
      %34 = vector.broadcast %cst_21 : f32 to vector<16x1xf32>
      %35 = arith.addf %33, %34 : vector<16x1xf32>
      %36 = math.log %35 : vector<16x1xf32>
      %37 = arith.subf %32, %36 : vector<16x1xf32>
      %38 = tpu.iota {dimensions = array<i32: 0>} : vector<16x1xi32>
      %39 = vector.broadcast %12 : i32 to vector<16x1xi32>
      %40 = arith.addi %38, %39 : vector<16x1xi32>
      %c11_i32 = arith.constant 11 : i32
      %41 = vector.broadcast %c11_i32 : i32 to vector<16x1xi32>
      %42 = arith.cmpi slt, %40, %41 : vector<16x1xi32>
      %cst_22 = arith.constant 0.000000e+00 : f32
      %43 = vector.broadcast %cst_22 : f32 to vector<16x1xf32>
      %44 = arith.select %42, %37, %43 : vector<16x1xi1>, vector<16x1xf32>
      %c0_23 = arith.constant 0 : index
      %c0_24 = arith.constant 0 : index
      %45 = vector.load %arg6[%c0_23, %c0_24] : memref<16x1xf32, #tpu.memory_space<vmem>>, vector<16x1xf32>
      tpu.vector_store %arg6[%c0_23, %c0_24], %44 {strides = array<i32>} : memref<16x1xf32, #tpu.memory_space<vmem>>, vector<16x1xf32>,
    } else {
    }
    return
  }
  func.func @transform_0(%arg0: i32, %arg1: i32) -> (i32, i32) {
    %c0_i32 = arith.constant 0 : i32
    %c0_i32_0 = arith.constant 0 : i32
    return %arg0, %c0_i32 : i32, i32
  }
  func.func @transform_1(%arg0: i32, %arg1: i32) -> (i32, i32) {
    %c0_i32 = arith.constant 0 : i32
    %c0_i32_0 = arith.constant 0 : i32
    return %c0_i32, %arg1 : i32, i32
  }
  func.func @transform_2(%arg0: i32, %arg1: i32) -> (i32, i32) {
    %c0_i32 = arith.constant 0 : i32
    %c0_i32_0 = arith.constant 0 : i32
    return %arg0, %c0_i32 : i32, i32
  }
  func.func @transform_3(%arg0: i32, %arg1: i32) -> (i32, i32) {
    %c0_i32 = arith.constant 0 : i32
    %c0_i32_0 = arith.constant 0 : i32
    return %c0_i32, %arg1 : i32, i32
  }
  func.func @transform_4(%arg0: i32, %arg1: i32) -> (i32, i32) {
    %c0_i32 = arith.constant 0 : i32
    %c0_i32_0 = arith.constant 0 : i32
    return %arg0, %c0_i32 : i32, i32
  }
}

</mosaic_0001>

<llo_original>
// kernel: _lambda_.1
$region0: #{_lambda_.1}
  #allocation0 [shape = 'u32[]', space=smem, size = 0x4, offset = 0x4, fixed_abs, tag = 'smem constant byte address 0x4 - core index']
  #allocation1 [shape = 'u32[144,128]{1,0:T(1,128)}', space=vmem, size = 0x12000, scoped, tag = 'internal scratch']
  #allocation2 [shape = 'f32[16,1]{1,0:T(8,128)}', space=vmem, size = 0x2000, scoped, tag = 'scratch operand']
  #allocation3 [shape = 'f32[16,1]{1,0:T(8,128)}', space=vmem, size = 0x2000, scoped, tag = 'scratch operand']
  %s0 = inlined_call_operand.vmem [shape: f32[16,128], index: 0, kind: input, shape index: {}]
  %s1 = inlined_call_operand.vmem [shape: f32[128,16], index: 1, kind: input, shape index: {}]
  %s2 = inlined_call_operand.vmem [shape: s32[16,1], index: 2, kind: input, shape index: {}]
  %s3 = inlined_call_operand.vmem [shape: s32[1,16], index: 3, kind: input, shape index: {}]
  %s4 = inlined_call_operand.vmem [shape: f32[16,1], index: 4, kind: output, shape index: {}]
  %s5 = sld [smem:[#allocation0]]
  $region42: #{_lambda_.1} parent=0
    _
  %s7 = ssub.s32 1, %s5
  %s8 = scalar_select 0, %s7, %s5
  // Predicated region
  $region2: #{_lambda_.1} parent=0 // pred_check
    _
  $region3: #{_lambda_.1} parent=0 // pred_check_branch
    %10 = sbr.rel (0) target = $region5
  $region4: #{_lambda_.1} parent=0 // pred_region
    _
  $region5: #{_lambda_.1} parent=0 // pred_fallthru
    _
  // Predicated region
  $region6: #{_lambda_.1} parent=0 // pred_check
    _
  $region7: #{_lambda_.1} parent=0 // pred_check_branch
    %12 = sbr.rel (0) target = $region9
  $region8: #{_lambda_.1} parent=0 // pred_region
    _
  $region9: #{_lambda_.1} parent=0 // pred_fallthru
    _
  // Predicated region
  $region10: #{_lambda_.1} parent=0 // pred_check
    _
  $region11: #{_lambda_.1} parent=0 // pred_check_branch
    %14 = sbr.rel (0) target = $region13
  $region12: #{_lambda_.1} parent=0 // pred_region
    _
  $region13: #{_lambda_.1} parent=0 // pred_fallthru
    _
  // Predicated region
  $region14: #{_lambda_.1} parent=0 // pred_check
    _
  $region15: #{_lambda_.1} parent=0 // pred_check_branch
    %16 = sbr.rel (0) target = $region17
  $region16: #{_lambda_.1} parent=0 // pred_region
    _
  $region17: #{_lambda_.1} parent=0 // pred_fallthru
    _
  %p17 = scmp.eq.s32.totalorder 0, 0
  // Predicated region
  $region18: #{_lambda_.1} parent=0 // pred_check
    %p18 = pneg %p17
  $region19: #{_lambda_.1} parent=0 // pred_check_branch
    %20 = sbr.rel (%p18) target = $region21
  $region20: #{_lambda_.1} parent=0 // pred_region
    %vm21 = vcmask 7168
    %22 = vst.msk [vmem:[#allocation2] sm:$0xff] %vm21, 0.0
    %23 = vst.msk [vmem:[#allocation2 + $0x8] sm:$0xff] %vm21, 0.0
    %24 = vst.msk [vmem:[#allocation3] sm:$0xff] %vm21, 0.0
    %25 = vst.msk [vmem:[#allocation3 + $0x8] sm:$0xff] %vm21, 0.0
  $region21: #{_lambda_.1} parent=0 // pred_fallthru
    _
  %v26 = vld [vmem:[%s0] sm:$0xff]
  %v27 = vld [vmem:[%s0 + $0x8] sm:$0xff]
  %v28 = vld [vmem:[%s1] sm:$0xff]
  %v29 = vld [vmem:[%s1 + $0x8] sm:$0xff]
  %v30 = vld [vmem:[%s1 + $0x10] sm:$0xff]
  %v31 = vld [vmem:[%s1 + $0x18] sm:$0xff]
  %v32 = vld [vmem:[%s1 + $0x20] sm:$0xff]
  %v33 = vld [vmem:[%s1 + $0x28] sm:$0xff]
  %v34 = vld [vmem:[%s1 + $0x30] sm:$0xff]
  %v35 = vld [vmem:[%s1 + $0x38] sm:$0xff]
  %v36 = vld [vmem:[%s1 + $0x40] sm:$0xff]
  %v37 = vld [vmem:[%s1 + $0x48] sm:$0xff]
  %v38 = vld [vmem:[%s1 + $0x50] sm:$0xff]
  %v39 = vld [vmem:[%s1 + $0x58] sm:$0xff]
  %v40 = vld [vmem:[%s1 + $0x60] sm:$0xff]
  %v41 = vld [vmem:[%s1 + $0x68] sm:$0xff]
  %v42 = vld [vmem:[%s1 + $0x70] sm:$0xff]
  %v43 = vld [vmem:[%s1 + $0x78] sm:$0xff]
  %44 = vmatprep.subr.mxu0 0.0
  %45 = vmatpush1.msra.mxu0 %v43
  %46 = vmatprep.subr.mxu0 0.0
  %47 = vmatpush1.msra.mxu0 %v42
  %48 = vmatprep.subr.mxu0 0.0
  %49 = vmatpush1.msra.mxu0 %v41
  %50 = vmatprep.subr.mxu0 0.0
  %51 = vmatpush1.msra.mxu0 %v40
  %52 = vmatprep.subr.mxu0 0.0
  %53 = vmatpush1.msra.mxu0 %v39
  %54 = vmatprep.subr.mxu0 0.0
  %55 = vmatpush1.msra.mxu0 %v38
  %56 = vmatprep.subr.mxu0 0.0
  %57 = vmatpush1.msra.mxu0 %v37
  %58 = vmatprep.subr.mxu0 0.0
  %59 = vmatpush1.msra.mxu0 %v36
  %60 = vmatprep.subr.mxu0 0.0
  %61 = vmatpush1.msra.mxu0 %v35
  %62 = vmatprep.subr.mxu0 0.0
  %63 = vmatpush1.msra.mxu0 %v34
  %64 = vmatprep.subr.mxu0 0.0
  %65 = vmatpush1.msra.mxu0 %v33
  %66 = vmatprep.subr.mxu0 0.0
  %67 = vmatpush1.msra.mxu0 %v32
  %68 = vmatprep.subr.mxu0 0.0
  %69 = vmatpush1.msra.mxu0 %v31
  %70 = vmatprep.subr.mxu0 0.0
  %71 = vmatpush1.msra.mxu0 %v30
  %72 = vmatprep.subr.mxu0 0.0
  %73 = vmatpush1.msra.mxu0 %v29
  %74 = vmatprep.subr.mxu0 0.0
  %75 = vmatpush1.msra.mxu0 %v28
  %76 = vmatprep.subr.mxu0 0.0
  %77 = vmatpush2.msra.mxu0 0.0
  %78 = vmatprep.subr.mxu0 0.0
  %79 = vmatpush2.msra.mxu0 0.0
  %80 = vmatprep.subr.mxu0 0.0
  %81 = vmatpush2.msra.mxu0 0.0
  %82 = vmatprep.subr.mxu0 0.0
  %83 = vmatpush2.msra.mxu0 0.0
  %84 = vmatprep.subr.mxu0 0.0
  %85 = vmatpush2.msra.mxu0 0.0
  %86 = vmatprep.subr.mxu0 0.0
  %87 = vmatpush2.msra.mxu0 0.0
  %88 = vmatprep.subr.mxu0 0.0
  %89 = vmatpush2.msra.mxu0 0.0
  %90 = vmatprep.subr.mxu0 0.0
  %91 = vmatpush2.msra.mxu0 0.0
  %92 = vmatprep.subr.mxu0 0.0
  %93 = vmatpush2.msra.mxu0 0.0
  %94 = vmatprep.subr.mxu0 0.0
  %95 = vmatpush2.msra.mxu0 0.0
  %96 = vmatprep.subr.mxu0 0.0
  %97 = vmatpush2.msra.mxu0 0.0
  %98 = vmatprep.subr.mxu0 0.0
  %99 = vmatpush2.msra.mxu0 0.0
  %100 = vmatprep.subr.mxu0 0.0
  %101 = vmatpush2.msra.mxu0 0.0
  %102 = vmatprep.subr.mxu0 0.0
  %103 = vmatpush2.msra.mxu0 0.0
  %104 = vmatprep.subr.mxu0 0.0
  %105 = vmatpush2.msra.mxu0 0.0
  %106 = vmatprep.subr.mxu0 0.0
  %107 = vmatpush2.msra.mxu0 0.0
  %108 = vmatprep.mubr.f32.mxu0 0.0
  %109 = vmatmul.mubr.f32.gmra.mxu0 %v26
  %v110 = vpop.f32.mrf.mxu0
  %v111 = vadd.f32 0.0, %v110
  %v112 = vpop.f32.mrf.mxu0
  %113 = vmatprep.mubr.f32.mxu0 0.0
  %114 = vmatmul.mubr.f32.gmra.mxu0 %v27
  %v115 = vpop.f32.mrf.mxu0
  %v116 = vadd.f32 0.0, %v115
  %v117 = vpop.f32.mrf.mxu0
  %118 = vdwg.mxu0
  %v119 = vmul.f32 %v111, 1.442695
  %v120 = vpow.pop %v119
  %v121 = vmul.f32 %v116, 1.442695
  %v122 = vpow.pop %v121
  %v123 = vld [vmem:[%s2] sm:$0xff]
  %v124 = vld [vmem:[%s2 + $0x8] sm:$0xff]
  %v125 = vld [vmem:[%s3] sm:$0x1]
  %126 = vset.pattern.permute.xlu0 0
  %127 = vperm.xlu0 %126, %v123
  %v128 = vpop.permute.xlu0 %127
  %129 = vset.pattern.permute.xlu0 0
  %130 = vperm.xlu0 %129, %v124
  %v131 = vpop.permute.xlu0 %130
  %v132 = vlaneseq
  %v133 = vshrl.u32 %v132, 7
  %v134 = vsub.s32 0, %v133
  %v135 = vrot.slane %v125, %v134
  %vm136 = vcmp.eq.s32.totalorder %v128, %v135
  %vm137 = vcmp.eq.s32.totalorder %v131, %v135
  %s138 = smul.u32 0, 16
  %s139 = smul.u32 0, 16
  %s140 = sadd.s32 %s138, 16
  %p141 = scmp.lt.s32.totalorder %s139, %s140
  %s142 = sadd.s32 %s139, 16
  %p143 = scmp.lt.s32.totalorder %s138, %s142
  %p144 = pnand %p141, %p143
  %p145 = pneg %p144
  %p146 = por %p145, %p17
  // Predicated region
  $region22: #{_lambda_.1} parent=0 // pred_check
    %p147 = pneg %p146
  $region23: #{_lambda_.1} parent=0 // pred_check_branch
    %149 = sbr.rel (%p147) target = $region25
  $region24: #{_lambda_.1} parent=0 // pred_region
    %v150 = vlaneseq
    %v151 = vshrl.u32 %v150, 7
    %v152 = vadd.s32 %v151, 8
    %v153 = vstv %s138
    %v154 = vadd.s32 %v151, %v153
    %v155 = vadd.s32 %v152, %v153
    %v156 = vlaneseq
    %v157 = vand.u32 %v156, 127
    %v158 = vstv %s139
    %v159 = vadd.s32 %v157, %v158
    %vm160 = vcmp.ne.s32.totalorder %v154, %v159
    %vm161 = vcmp.ne.s32.totalorder %v155, %v159
    %vm162 = vcmp.lt.s32.totalorder %v159, 11
    %vm163 = vmand %vm160, %vm162
    %vm164 = vmand %vm161, %vm162
    %v165 = vld [vmem:[#allocation3] sm:$0xff]
    %v166 = vld [vmem:[#allocation3 + $0x8] sm:$0xff]
    %v167 = vsel %vm163, %v120, 0.0
    %v168 = vsel %vm164, %v122, 0.0
    %vm169 = vcmask 130048
    %v170 = vsel %vm169, %v167, 0.0
    %171 = vadd.xlane.f32.xlu0 %v170
    %v172 = vpop.xlane.xlu0 %171
    %v173 = vsel %vm169, %v168, 0.0
    %174 = vadd.xlane.f32.xlu0 %v173
    %v175 = vpop.xlane.xlu0 %174
    %v176 = vadd.f32 %v165, %v172
    %v177 = vadd.f32 %v166, %v175
    %vm178 = vcmask 7168
    %179 = vst.msk [vmem:[#allocation3] sm:$0xff] %vm178, %v176
    %180 = vst.msk [vmem:[#allocation3 + $0x8] sm:$0xff] %vm178, %v177
    %v181 = vld [vmem:[#allocation2] sm:$0xff]
    %v182 = vld [vmem:[#allocation2 + $0x8] sm:$0xff]
    %vm183 = vmand %vm136, %vm163
    %vm184 = vmand %vm137, %vm164
    %v185 = vsel %vm183, %v120, 0.0
    %v186 = vsel %vm184, %v122, 0.0
    %v187 = vsel %vm169, %v185, 0.0
    %188 = vadd.xlane.f32.xlu0 %v187
    %v189 = vpop.xlane.xlu0 %188
    %v190 = vsel %vm169, %v186, 0.0
    %191 = vadd.xlane.f32.xlu0 %v190
    %v192 = vpop.xlane.xlu0 %191
    %v193 = vadd.f32 %v181, %v189
    %v194 = vadd.f32 %v182, %v192
    %195 = vst.msk [vmem:[#allocation2] sm:$0xff] %vm178, %v193
    %196 = vst.msk [vmem:[#allocation2 + $0x8] sm:$0xff] %vm178, %v194
  $region25: #{_lambda_.1} parent=0 // pred_fallthru
    _
  %p197 = pneg %p146
  // Predicated region
  $region26: #{_lambda_.1} parent=0 // pred_check
    _
  $region27: #{_lambda_.1} parent=0 // pred_check_branch
    %199 = sbr.rel (%p146) target = $region29
  $region28: #{_lambda_.1} parent=0 // pred_region
    %v200 = vld [vmem:[#allocation3] sm:$0xff]
    %v201 = vld [vmem:[#allocation3 + $0x8] sm:$0xff]
    %vm202 = vcmask 130048
    %v203 = vsel %vm202, %v120, 0.0
    %204 = vadd.xlane.f32.xlu0 %v203
    %v205 = vpop.xlane.xlu0 %204
    %v206 = vsel %vm202, %v122, 0.0
    %207 = vadd.xlane.f32.xlu0 %v206
    %v208 = vpop.xlane.xlu0 %207
    %v209 = vadd.f32 %v200, %v205
    %v210 = vadd.f32 %v201, %v208
    %vm211 = vcmask 7168
    %212 = vst.msk [vmem:[#allocation3] sm:$0xff] %vm211, %v209
    %213 = vst.msk [vmem:[#allocation3 + $0x8] sm:$0xff] %vm211, %v210
    %v214 = vld [vmem:[#allocation2] sm:$0xff]
    %v215 = vld [vmem:[#allocation2 + $0x8] sm:$0xff]
    %v216 = vsel %vm136, %v120, 0.0
    %v217 = vsel %vm137, %v122, 0.0
    %v218 = vsel %vm202, %v216, 0.0
    %219 = vadd.xlane.f32.xlu0 %v218
    %v220 = vpop.xlane.xlu0 %219
    %v221 = vsel %vm202, %v217, 0.0
    %222 = vadd.xlane.f32.xlu0 %v221
    %v223 = vpop.xlane.xlu0 %222
    %v224 = vadd.f32 %v214, %v220
    %v225 = vadd.f32 %v215, %v223
    %226 = vst.msk [vmem:[#allocation2] sm:$0xff] %vm211, %v224
    %227 = vst.msk [vmem:[#allocation2 + $0x8] sm:$0xff] %vm211, %v225
  $region29: #{_lambda_.1} parent=0 // pred_fallthru
    _
  // Predicated region
  $region30: #{_lambda_.1} parent=0 // pred_check
    %p228 = pneg %p17
  $region31: #{_lambda_.1} parent=0 // pred_check_branch
    %230 = sbr.rel (%p228) target = $region33
  $region32: #{_lambda_.1} parent=0 // pred_region
    %v231 = vld [vmem:[#allocation3] sm:$0xff]
    %v232 = vld [vmem:[#allocation3 + $0x8] sm:$0xff]
    %v233 = vadd.f32 %v231, 1e-08
    %v234 = vadd.f32 %v232, 1e-08
    %v235 = vlog2.pop %v233
    %v236 = vmul.f32 %v235, 0.6931472
    %v237 = vlog2.pop %v234
    %v238 = vmul.f32 %v237, 0.6931472
    %v239 = vld [vmem:[#allocation2] sm:$0xff]
    %v240 = vld [vmem:[#allocation2 + $0x8] sm:$0xff]
    %v241 = vadd.f32 %v239, 1e-08
    %v242 = vadd.f32 %v240, 1e-08
    %v243 = vlog2.pop %v241
    %v244 = vmul.f32 %v243, 0.6931472
    %v245 = vlog2.pop %v242
    %v246 = vmul.f32 %v245, 0.6931472
    %v247 = vsub.f32 %v236, %v244
    %v248 = vsub.f32 %v238, %v246
    %v249 = vlaneseq
    %v250 = vshrl.u32 %v249, 7
    %v251 = vadd.s32 %v250, 8
    %v252 = vstv %s138
    %v253 = vadd.s32 %v250, %v252
    %v254 = vadd.s32 %v251, %v252
    %vm255 = vcmp.lt.s32.totalorder %v253, 11
    %vm256 = vcmp.lt.s32.totalorder %v254, 11
    %v257 = vsel %vm255, %v247, 0.0
    %v258 = vsel %vm256, %v248, 0.0
    %vm259 = vcmask 7168
    %260 = vst.msk [vmem:[%s4] sm:$0xff] %vm259, %v257
    %261 = vst.msk [vmem:[%s4 + $0x8] sm:$0xff] %vm259, %v258
  $region33: #{_lambda_.1} parent=0 // pred_fallthru
    _
  // Predicated region
  $region34: #{_lambda_.1} parent=0 // pred_check
    _
  $region35: #{_lambda_.1} parent=0 // pred_check_branch
    %263 = sbr.rel (0) target = $region37
  $region36: #{_lambda_.1} parent=0 // pred_region
    _
  $region37: #{_lambda_.1} parent=0 // pred_fallthru
    _
  // Predicated region
  $region38: #{_lambda_.1} parent=0 // pred_check
    _
  $region39: #{_lambda_.1} parent=0 // pred_check_branch
    %265 = sbr.rel (0) target = $region41
  $region40: #{_lambda_.1} parent=0 // pred_region
    _
  $region41: #{_lambda_.1} parent=0 // pred_fallthru
    _

</llo_original>
